<compile_context>
chip_gen: v6e
topology: v6e:2x2x1
jax: 0.10.0
libtpu: 0.0.40
codegen_flags: <defaults>
</compile_context>

<pallas_src>
import jax
import jax.numpy as jnp
from jax.experimental import pallas as pl
from jax.experimental.pallas import tpu as pltpu


def _round_up(x, m):
    return ((x + m - 1) // m) * m


def _policy_head_kernel(x_ref, w1_ref, b1_ref, w2_ref, b2_ref, mask_ref, o_ref):
    # x_ref:    (bm, F)      bf16 feature tile
    # w1_ref:   (F, H)       bf16 first linear weight (pre-transposed)
    # b1_ref:   (1, H)       f32
    # w2_ref:   (H, Ap)      bf16 second linear weight (pre-transposed, A padded to 128*k)
    # b2_ref:   (1, Ap)      f32
    # mask_ref: (bm, Ap)     f32 action mask tile (>0 = legal)
    # o_ref:    (bm, Ap)     f32 masked logits tile
    h = jnp.dot(x_ref[...], w1_ref[...], preferred_element_type=jnp.float32)
    h = jnp.maximum(h + b1_ref[...], 0.0)            # bias + ReLU (f32 epilogue)
    # Dropout(0.1): identity in eval mode.
    logits = jnp.dot(h.astype(w2_ref.dtype), w2_ref[...],
                     preferred_element_type=jnp.float32) + b2_ref[...]
    # Same additive semantics as the PyTorch module for binary masks, one vselect.
    o_ref[...] = logits + jnp.where(mask_ref[...] > 0.0, 0.0, -1e9)


def prepare_policy_params(w1_t, b1, w2_t, b2):
    """One-time parameter prep (do NOT call per forward):
    - weights pre-transposed to [in, out] (PyTorch nn.Linear stores [out, in])
    - matmul weights cast to bf16 (MXU-native), biases kept f32
    - action dim padded to a multiple of 128 for lane-dense output stores.
    """
    f_dim, hid = w1_t.shape
    num_actions = w2_t.shape[1]
    a_pad = _round_up(num_actions, 128)
    w2_p = jnp.zeros((hid, a_pad), jnp.float32).at[:, :num_actions].set(
        w2_t.astype(jnp.float32))
    b2_p = jnp.zeros((a_pad,), jnp.float32).at[:num_actions].set(
        b2.astype(jnp.float32))
    return {
        "w1": w1_t.astype(jnp.bfloat16),                 # (F, H)
        "b1": b1.reshape(1, hid).astype(jnp.float32),    # (1, H)
        "w2": w2_p.astype(jnp.bfloat16),                 # (H, Ap)
        "b2": b2_p.reshape(1, a_pad).astype(jnp.float32),# (1, Ap)
        "num_actions": num_actions,
    }


def mahjong_policy_forward(features, params, action_mask=None, *, bm=256):
    """features: [B, F] float; params from prepare_policy_params;
    action_mask: [B, num_actions] (1=legal) or None. Returns logits [B, num_actions] f32."""
    w1, b1, w2, b2 = params["w1"], params["b1"], params["w2"], params["b2"]
    num_actions = params["num_actions"]
    B, f_dim = features.shape
    hid = w1.shape[1]
    a_pad = w2.shape[1]

    # Batch tiling: large tile (up to bm, multiple of 8) + cdiv grid with a
    # zero-padded ragged tail so no rows are dropped.
    bm_eff = min(bm, _round_up(B, 8))
    num_tiles = pl.cdiv(B, bm_eff)
    b_pad = num_tiles * bm_eff

    x = features.astype(jnp.bfloat16)
    if b_pad != B:
        x = jnp.pad(x, ((0, b_pad - B), (0, 0)))

    if action_mask is None:
        mask = jnp.ones((B, num_actions), jnp.float32)
    else:
        mask = action_mask.astype(jnp.float32)
    mask_p = jnp.zeros((b_pad, a_pad), jnp.float32).at[:B, :num_actions].set(mask)

    out = pl.pallas_call(
        _policy_head_kernel,
        out_shape=jax.ShapeDtypeStruct((b_pad, a_pad), jnp.float32),
        grid_spec=pl.GridSpec(
            grid=(num_tiles,),
            in_specs=[
                pl.BlockSpec((bm_eff, f_dim), lambda i: (i, 0)),  # features tile
                pl.BlockSpec((f_dim, hid), lambda i: (0, 0)),     # W1^T (resident)
                pl.BlockSpec((1, hid), lambda i: (0, 0)),         # b1   (resident)
                pl.BlockSpec((hid, a_pad), lambda i: (0, 0)),     # W2^T (resident)
                pl.BlockSpec((1, a_pad), lambda i: (0, 0)),       # b2   (resident)
                pl.BlockSpec((bm_eff, a_pad), lambda i: (i, 0)),  # mask tile
            ],
            out_specs=pl.BlockSpec((bm_eff, a_pad), lambda i: (i, 0)),
        ),
        compiler_params=pltpu.CompilerParams(
            dimension_semantics=("parallel",),
        ),
    )(x, w1, b1, w2, b2, mask_p)

    return out[:B, :num_actions]


def _init_linear(key, fan_in, fan_out):
    """Mimic PyTorch nn.Linear default init (uniform +-1/sqrt(fan_in)).
    Returns weight already transposed to [fan_in, fan_out] and bias [fan_out]."""
    kw, kb = jax.random.split(key)
    bound = 1.0 / jnp.sqrt(jnp.float32(fan_in))
    w_t = jax.random.uniform(kw, (fan_in, fan_out), jnp.float32, -bound, bound)
    b = jax.random.uniform(kb, (fan_out,), jnp.float32, -bound, bound)
    return w_t, b


def _reference_forward(features, w1_t, b1, w2_t, b2, action_mask,
                       matmul_dtype=jnp.float32):
    """Pure-JAX reference of the PyTorch forward. matmul_dtype lets us mirror the
    kernel's bf16 MXU operands (f32 accumulation) for a tight comparison."""
    x = features.astype(matmul_dtype)
    h = jnp.dot(x, w1_t.astype(matmul_dtype),
                preferred_element_type=jnp.float32) + b1
    h = jnp.maximum(h, 0.0)
    logits = jnp.dot(h.astype(matmul_dtype), w2_t.astype(matmul_dtype),
                     preferred_element_type=jnp.float32) + b2
    if action_mask is not None:
        logits = logits + (1.0 - action_mask.astype(jnp.float32)) * (-1e9)
    return logits


if __name__ == "__main__":
    # Small shapes consistent with the module: feature_dim=32, hidden=2*32=64,
    # num_actions=10 (exercises the 128-lane padding), batch=6 (exercises the
    # ragged-batch cdiv + padding path).
    B, FEAT, ACT = 6, 32, 10
    HID = 2 * FEAT

    key = jax.random.PRNGKey(0)
    k_x, k_m, k_l1, k_l2 = jax.random.split(key, 4)

    features = jax.random.normal(k_x, (B, FEAT), jnp.float32)
    action_mask = (jax.random.uniform(k_m, (B, ACT)) > 0.3).astype(jnp.float32)

    w1_t, b1 = _init_linear(k_l1, FEAT, HID)   # Linear(32 -> 64)
    w2_t, b2 = _init_linear(k_l2, HID, ACT)    # Linear(64 -> num_actions)

    params = prepare_policy_params(w1_t, b1, w2_t, b2)   # one-time prep

    logits = mahjong_policy_forward(features, params, action_mask)
    logits = jax.block_until_ready(logits)
    assert logits.shape == (B, ACT)

    # Tight check against a reference that mirrors the kernel's numerics
    # (bf16 matmul operands, f32 accumulation).
    ref_bf16 = _reference_forward(features, w1_t, b1, w2_t, b2, action_mask,
                                  matmul_dtype=jnp.bfloat16)
    assert jnp.allclose(logits, ref_bf16, atol=2e-3, rtol=2e-3), "mismatch vs bf16 reference"

    # Looser sanity check against the original pure-f32 module semantics
    # (difference is only bf16 operand rounding).
    ref_f32 = _reference_forward(features, w1_t, b1, w2_t, b2, action_mask,
                                 matmul_dtype=jnp.float32)
    assert jnp.allclose(logits, ref_f32, atol=1e-1, rtol=1e-1), "mismatch vs f32 reference"

    print("KERNEL_OK")
</pallas_src>

<mosaic_0001>
module attributes {stable_mosaic.version = 11 : i64} {
  func.func @_policy_head_kernel(%arg0: i32, %arg1: memref<8x32xbf16, #tpu.memory_space<vmem>>, %arg2: memref<32x64xbf16, #tpu.memory_space<vmem>>, %arg3: memref<1x64xf32, #tpu.memory_space<vmem>>, %arg4: memref<64x128xbf16, #tpu.memory_space<vmem>>, %arg5: memref<1x128xf32, #tpu.memory_space<vmem>>, %arg6: memref<8x128xf32, #tpu.memory_space<vmem>>, %arg7: memref<8x128xf32, #tpu.memory_space<vmem>>) attributes {dimension_semantics = [#tpu.dimension_semantics<parallel>], iteration_bounds = array<i64: 1>, scalar_prefetch = 0 : i64, scratch_operands = 0 : i64, tpu.core_type = #tpu.core_type<tc>, window_params = [{transform_indices = @transform_0, window_bounds = array<i64: 8, 32>}, {pipeline_mode = #tpu.pipeline_mode<synchronous>, transform_indices = @transform_1, window_bounds = array<i64: 32, 64>}, {pipeline_mode = #tpu.pipeline_mode<synchronous>, transform_indices = @transform_2, window_bounds = array<i64: 1, 64>}, {pipeline_mode = #tpu.pipeline_mode<synchronous>, transform_indices = @transform_3, window_bounds = array<i64: 64, 128>}, {pipeline_mode = #tpu.pipeline_mode<synchronous>, transform_indices = @transform_4, window_bounds = array<i64: 1, 128>}, {transform_indices = @transform_5, window_bounds = array<i64: 8, 128>}, {transform_indices = @transform_6, window_bounds = array<i64: 8, 128>}]} {
    %c0 = arith.constant 0 : index
    %c0_0 = arith.constant 0 : index
    %0 = vector.load %arg1[%c0, %c0_0] : memref<8x32xbf16, #tpu.memory_space<vmem>>, vector<8x32xbf16>
    %c0_1 = arith.constant 0 : index
    %c0_2 = arith.constant 0 : index
    %1 = vector.load %arg2[%c0_1, %c0_2] : memref<32x64xbf16, #tpu.memory_space<vmem>>, vector<32x64xbf16>
    %cst = arith.constant dense<0.000000e+00> : vector<8x64xf32>
    %2 = tpu.matmul %0, %1, %cst {dimension_numbers = #tpu.dot_dimension_numbers<[1], [0], [0], [1], [0, 0, 1, 1], [], []>} : vector<8x32xbf16>, vector<32x64xbf16>, vector<8x64xf32> -> vector<8x64xf32>
    %c0_3 = arith.constant 0 : index
    %c0_4 = arith.constant 0 : index
    %3 = vector.load %arg3[%c0_3, %c0_4] : memref<1x64xf32, #tpu.memory_space<vmem>>, vector<1x64xf32>
    %4 = vector.broadcast %3 : vector<1x64xf32> to vector<8x64xf32>
    %5 = arith.addf %2, %4 : vector<8x64xf32>
    %cst_5 = arith.constant 0.000000e+00 : f32
    %6 = vector.broadcast %cst_5 : f32 to vector<8x64xf32>
    %7 = arith.maximumf %5, %6 : vector<8x64xf32>
    %8 = arith.truncf %7 : vector<8x64xf32> to vector<8x64xbf16>
    %c0_6 = arith.constant 0 : index
    %c0_7 = arith.constant 0 : index
    %9 = vector.load %arg4[%c0_6, %c0_7] : memref<64x128xbf16, #tpu.memory_space<vmem>>, vector<64x128xbf16>
    %cst_8 = arith.constant dense<0.000000e+00> : vector<8x128xf32>
    %10 = tpu.matmul %8, %9, %cst_8 {dimension_numbers = #tpu.dot_dimension_numbers<[1], [0], [0], [1], [0, 0, 1, 1], [], []>} : vector<8x64xbf16>, vector<64x128xbf16>, vector<8x128xf32> -> vector<8x128xf32>
    %c0_9 = arith.constant 0 : index
    %c0_10 = arith.constant 0 : index
    %11 = vector.load %arg5[%c0_9, %c0_10] : memref<1x128xf32, #tpu.memory_space<vmem>>, vector<1x128xf32>
    %12 = vector.broadcast %11 : vector<1x128xf32> to vector<8x128xf32>
    %13 = arith.addf %10, %12 : vector<8x128xf32>
    %c0_11 = arith.constant 0 : index
    %c0_12 = arith.constant 0 : index
    %14 = vector.load %arg6[%c0_11, %c0_12] : memref<8x128xf32, #tpu.memory_space<vmem>>, vector<8x128xf32>
    %cst_13 = arith.constant 0.000000e+00 : f32
    %15 = vector.broadcast %cst_13 : f32 to vector<8x128xf32>
    %16 = arith.cmpf ogt, %14, %15 : vector<8x128xf32>
    %cst_14 = arith.constant 0.000000e+00 : f32
    %cst_15 = arith.constant -1.000000e+09 : f32
    %17 = vector.broadcast %cst_14 : f32 to vector<8x128xf32>
    %18 = vector.broadcast %cst_15 : f32 to vector<8x128xf32>
    %19 = arith.select %16, %17, %18 : vector<8x128xi1>, vector<8x128xf32>
    %20 = arith.addf %13, %19 : vector<8x128xf32>
    %c0_16 = arith.constant 0 : index
    %c0_17 = arith.constant 0 : index
    %21 = vector.load %arg7[%c0_16, %c0_17] : memref<8x128xf32, #tpu.memory_space<vmem>>, vector<8x128xf32>
    tpu.vector_store %arg7[%c0_16, %c0_17], %20 {strides = array<i32>} : memref<8x128xf32, #tpu.memory_space<vmem>>, vector<8x128xf32>,
    return
  }
  func.func @transform_0(%arg0: i32) -> (i32, i32) {
    %c0_i32 = arith.constant 0 : i32
    %c0_i32_0 = arith.constant 0 : i32
    return %arg0, %c0_i32 : i32, i32
  }
  func.func @transform_1(%arg0: i32) -> (i32, i32) {
    %c0_i32 = arith.constant 0 : i32
    %c0_i32_0 = arith.constant 0 : i32
    %c0_i32_1 = arith.constant 0 : i32
    return %c0_i32, %c0_i32_0 : i32, i32
  }
  func.func @transform_2(%arg0: i32) -> (i32, i32) {
    %c0_i32 = arith.constant 0 : i32
    %c0_i32_0 = arith.constant 0 : i32
    %c0_i32_1 = arith.constant 0 : i32
    return %c0_i32, %c0_i32_0 : i32, i32
  }
  func.func @transform_3(%arg0: i32) -> (i32, i32) {
    %c0_i32 = arith.constant 0 : i32
    %c0_i32_0 = arith.constant 0 : i32
    %c0_i32_1 = arith.constant 0 : i32
    return %c0_i32, %c0_i32_0 : i32, i32
  }
  func.func @transform_4(%arg0: i32) -> (i32, i32) {
    %c0_i32 = arith.constant 0 : i32
    %c0_i32_0 = arith.constant 0 : i32
    %c0_i32_1 = arith.constant 0 : i32
    return %c0_i32, %c0_i32_0 : i32, i32
  }
  func.func @transform_5(%arg0: i32) -> (i32, i32) {
    %c0_i32 = arith.constant 0 : i32
    %c0_i32_0 = arith.constant 0 : i32
    return %arg0, %c0_i32 : i32, i32
  }
  func.func @transform_6(%arg0: i32) -> (i32, i32) {
    %c0_i32 = arith.constant 0 : i32
    %c0_i32_0 = arith.constant 0 : i32
    return %arg0, %c0_i32 : i32, i32
  }
}

</mosaic_0001>

<llo_original>
// kernel: tpu_custom_call.1
$region0: #{tpu_custom_call.1}
  #allocation0 [shape = 'u32[]', space=smem, size = 0x4, offset = 0x4, fixed_abs, tag = 'smem constant byte address 0x4 - core index']
  #allocation1 [shape = 'u32[144,128]{1,0:T(1,128)}', space=vmem, size = 0x12000, scoped, tag = 'internal scratch']
  %s0 = inlined_call_operand.hbm [shape: bf16[8,32], index: 0, kind: input, shape index: {}]
  %s1 = inlined_call_operand.hbm [shape: bf16[32,64], index: 1, kind: input, shape index: {}]
  %s2 = inlined_call_operand.vmem [shape: f32[1,64], index: 2, kind: input, shape index: {}]
  %s3 = inlined_call_operand.hbm [shape: bf16[64,128], index: 3, kind: input, shape index: {}]
  %s4 = inlined_call_operand.hbm [shape: f32[1,128], index: 4, kind: input, shape index: {}]
  %s5 = inlined_call_operand.vmem [shape: f32[8,128], index: 5, kind: input, shape index: {}]
  %s6 = inlined_call_operand.hbm [shape: f32[8,128], index: 6, kind: output, shape index: {}]
  %s7 = sld [smem:[#allocation0]]
  $region50: #{tpu_custom_call.1} parent=0
    _
  %s9 = ssub.s32 1, %s7
  %s10 = scalar_select 0, %s9, %s7
  $region1: #{tpu_custom_call.1} parent=0
    #allocation2 [shape = 'u8[2048]{0}', space=vmem, size = 0x800, scoped, tag = 'input window, operand 0, single buffered']
    #allocation3 [shape = 's32[1]{0}', space=sflag, size = 0x4, scoped, tag = 'scoped memory for tpu_custom_call.1']
    #allocation4 [shape = 's32[1]{0}', space=sflag, size = 0x4, scoped, tag = 'scoped memory for tpu_custom_call.1']
    #allocation5 [shape = 'u8[8192]{0}', space=vmem, size = 0x2000, scoped, tag = 'input window, operand 1, single buffered']
    #allocation6 [shape = 's32[1]{0}', space=sflag, size = 0x4, scoped, tag = 'scoped memory for tpu_custom_call.1']
    #allocation7 [shape = 'u8[16384]{0}', space=vmem, size = 0x4000, scoped, tag = 'input window, operand 3, single buffered']
    #allocation8 [shape = 'u8[512]{0}', space=vmem, size = 0x400, scoped, tag = 'input window, operand 4, single buffered']
    #allocation9 [shape = 's32[1]{0}', space=sflag, size = 0x4, scoped, tag = 'scoped memory for tpu_custom_call.1']
    #allocation10 [shape = 'u8[4096]{0}', space=vmem, size = 0x1000, scoped, tag = 'output window, operand 0, single buffered']
    %11 = vsyncpa [#allocation3], 0
    %12 = vsyncpa [#allocation6], 0
    %13 = vsyncpa [#allocation9], 0
    %14 = vsyncpa [#allocation4], 0
    // Predicated region
    $region2: #{tpu_custom_call.1} parent=1 // pred_check
      _
    $region3: #{tpu_custom_call.1} parent=1 // pred_check_branch
      %16 = sbr.rel (0) target = $region5
    $region4: #{tpu_custom_call.1} parent=1 // pred_region
      %s18 = ssub.s32 64, 64
      %19 = vsyncadd [#allocation3], %s18
      %s21 = sshll.u32 [#allocation2], 4
      %s22 = int_to_ptr.vmem [resolvable:$true] %s21
      %24 = dma.hbm_to_vmem [thread:$0]  %s0, 64, %s22, [#allocation3]
    $region5: #{tpu_custom_call.1} parent=1 // pred_fallthru
      _
    // Predicated region
    $region6: #{tpu_custom_call.1} parent=1 // pred_check
      _
    $region7: #{tpu_custom_call.1} parent=1 // pred_check_branch
      %26 = sbr.rel (0) target = $region9
    $region8: #{tpu_custom_call.1} parent=1 // pred_region
      %s28 = ssub.s32 256, 256
      %29 = vsyncadd [#allocation6], %s28
      %s30 = sshll.u32 [#allocation5], 4
      %s31 = int_to_ptr.vmem [resolvable:$true] %s30
      %36 = dma.hbm_to_vmem [thread:$0]  %s1, 256, %s31, [#allocation6], 64, 64, 4
    $region9: #{tpu_custom_call.1} parent=1 // pred_fallthru
      _
    // Predicated region
    $region10: #{tpu_custom_call.1} parent=1 // pred_check
      _
    $region11: #{tpu_custom_call.1} parent=1 // pred_check_branch
      %38 = sbr.rel (0) target = $region13
    $region12: #{tpu_custom_call.1} parent=1 // pred_region
      _
    $region13: #{tpu_custom_call.1} parent=1 // pred_fallthru
      _
    // Predicated region
    $region14: #{tpu_custom_call.1} parent=1 // pred_check
      _
    $region15: #{tpu_custom_call.1} parent=1 // pred_check_branch
      %40 = sbr.rel (0) target = $region17
    $region16: #{tpu_custom_call.1} parent=1 // pred_region
      %s42 = ssub.s32 512, 512
      %43 = vsyncadd [#allocation6], %s42
      %s44 = sshll.u32 [#allocation7], 4
      %s45 = int_to_ptr.vmem [resolvable:$true] %s44
      %50 = dma.hbm_to_vmem [thread:$0]  %s3, 512, %s45, [#allocation6], 64, 64, 4
    $region17: #{tpu_custom_call.1} parent=1 // pred_fallthru
      _
    // Predicated region
    $region18: #{tpu_custom_call.1} parent=1 // pred_check
      _
    $region19: #{tpu_custom_call.1} parent=1 // pred_check_branch
      %52 = sbr.rel (0) target = $region21
    $region20: #{tpu_custom_call.1} parent=1 // pred_region
      %s54 = ssub.s32 16, 16
      %55 = vsyncadd [#allocation9], %s54
      %s57 = sshll.u32 [#allocation8], 4
      %s58 = int_to_ptr.vmem [resolvable:$true] %s57
      %60 = dma.hbm_to_vmem [thread:$0]  %s4, 16, %s58, [#allocation9]
    $region21: #{tpu_custom_call.1} parent=1 // pred_fallthru
      _
    // Predicated region
    $region22: #{tpu_custom_call.1} parent=1 // pred_check
      _
    $region23: #{tpu_custom_call.1} parent=1 // pred_check_branch
      %62 = sbr.rel (0) target = $region25
    $region24: #{tpu_custom_call.1} parent=1 // pred_region
      _
    $region25: #{tpu_custom_call.1} parent=1 // pred_fallthru
      _
    // Predicated region
    $region26: #{tpu_custom_call.1} parent=1 // pred_check
      _
    $region27: #{tpu_custom_call.1} parent=1 // pred_check_branch
      %64 = sbr.rel (0) target = $region29
    $region28: #{tpu_custom_call.1} parent=1 // pred_region
      %65 = dma.done [#allocation3], 64
    $region29: #{tpu_custom_call.1} parent=1 // pred_fallthru
      _
    // Predicated region
    $region30: #{tpu_custom_call.1} parent=1 // pred_check
      _
    $region31: #{tpu_custom_call.1} parent=1 // pred_check_branch
      %67 = sbr.rel (0) target = $region33
    $region32: #{tpu_custom_call.1} parent=1 // pred_region
      %68 = dma.done [#allocation6], 256
    $region33: #{tpu_custom_call.1} parent=1 // pred_fallthru
      _
    // Predicated region
    $region34: #{tpu_custom_call.1} parent=1 // pred_check
      _
    $region35: #{tpu_custom_call.1} parent=1 // pred_check_branch
      %70 = sbr.rel (0) target = $region37
    $region36: #{tpu_custom_call.1} parent=1 // pred_region
      %71 = dma.done [#allocation6], 512
    $region37: #{tpu_custom_call.1} parent=1 // pred_fallthru
      _
    // Predicated region
    $region38: #{tpu_custom_call.1} parent=1 // pred_check
      _
    $region39: #{tpu_custom_call.1} parent=1 // pred_check_branch
      %73 = sbr.rel (0) target = $region41
    $region40: #{tpu_custom_call.1} parent=1 // pred_region
      %74 = dma.done [#allocation9], 16
    $region41: #{tpu_custom_call.1} parent=1 // pred_fallthru
      _
    %v76 = vld [vmem:[#allocation2] sm:$0xf]
    %v77 = vld [vmem:[#allocation5] sm:$0xf]
    %v78 = vld [vmem:[#allocation5 + $0x4] sm:$0xf]
    %v79 = vld [vmem:[#allocation5 + $0x8] sm:$0xf]
    %v80 = vld [vmem:[#allocation5 + $0xc] sm:$0xf]
    %v81 = vld [vmem:[%s2] sm:$0x1]
    %v83 = vlaneseq
    %v84 = vshrl.u32 %v83, 7
    %v85 = vsub.s32 0, %v84
    %v86 = vrot.slane %v81, %v85
    %v92 = vunpack.c.l.b16 %v77
    %v93 = vunpack.c.l.b16 %v78
    %v94 = vunpack.c.l.b16 %v79
    %v95 = vunpack.c.l.b16 %v80
    %v96 = vpack.c.b16 %v93, %v92
    %v97 = vpack.c.b16 %v95, %v94
    %vm100 = vcmask 261120
    %v102 = vsel %vm100, %v76, 0
    %104 = vmatprep.subr.bf16.mxu0 0
    %105 = vmatpush1.bf16.msra.mxu0 0
    %106 = vmatprep.subr.bf16.mxu0 0
    %107 = vmatpush1.bf16.msra.mxu0 0
    %108 = vmatprep.subr.bf16.mxu0 0
    %109 = vmatpush1.bf16.msra.mxu0 0
    %110 = vmatprep.subr.bf16.mxu0 0
    %111 = vmatpush1.bf16.msra.mxu0 0
    %112 = vmatprep.subr.bf16.mxu0 0
    %113 = vmatpush1.bf16.msra.mxu0 0
    %114 = vmatprep.subr.bf16.mxu0 0
    %115 = vmatpush1.bf16.msra.mxu0 0
    %116 = vmatprep.subr.bf16.mxu0 0
    %117 = vmatpush1.bf16.msra.mxu0 %v97
    %118 = vmatprep.subr.bf16.mxu0 0
    %119 = vmatpush1.bf16.msra.mxu0 %v96
    %120 = vmatprep.subr.bf16.mxu0 0
    %121 = vmatpush2.bf16.msra.mxu0 0
    %122 = vmatprep.subr.bf16.mxu0 0
    %123 = vmatpush2.bf16.msra.mxu0 0
    %124 = vmatprep.subr.bf16.mxu0 0
    %125 = vmatpush2.bf16.msra.mxu0 0
    %126 = vmatprep.subr.bf16.mxu0 0
    %127 = vmatpush2.bf16.msra.mxu0 0
    %128 = vmatprep.subr.bf16.mxu0 0
    %129 = vmatpush2.bf16.msra.mxu0 0
    %130 = vmatprep.subr.bf16.mxu0 0
    %131 = vmatpush2.bf16.msra.mxu0 0
    %132 = vmatprep.subr.bf16.mxu0 0
    %133 = vmatpush2.bf16.msra.mxu0 0
    %134 = vmatprep.subr.bf16.mxu0 0
    %135 = vmatpush2.bf16.msra.mxu0 0
    %136 = vmatprep.mubr.bf16.mxu0 0
    %137 = vmatmul.mubr.bf16.gmra.mxu0 %v102
    %v138 = vpop.f32.mrf.mxu0
    %v139 = vadd.f32 %v86, %v138
    %v140 = vpop.f32.mrf.mxu0
    %v141 = vpop.f32.mrf.mxu0
    %v142 = vpop.f32.mrf.mxu0
    %143 = vdwg.mxu0
    %v144 = vmax.f32 %v139, 0.0
    %v145 = vpack.c.bf16 %v144, %v144
    %v146 = vld [vmem:[#allocation7] sm:$0xf]
    %v147 = vld [vmem:[#allocation7 + $0x4] sm:$0xf]
    %v148 = vld [vmem:[#allocation7 + $0x8] sm:$0xf]
    %v149 = vld [vmem:[#allocation7 + $0xc] sm:$0xf]
    %v150 = vld [vmem:[#allocation7 + $0x10] sm:$0xf]
    %v151 = vld [vmem:[#allocation7 + $0x14] sm:$0xf]
    %v152 = vld [vmem:[#allocation7 + $0x18] sm:$0xf]
    %v153 = vld [vmem:[#allocation7 + $0x1c] sm:$0xf]
    %v154 = vld [vmem:[#allocation8] sm:$0x1]
    %v156 = vlaneseq
    %v157 = vshrl.u32 %v156, 7
    %v158 = vsub.s32 0, %v157
    %v159 = vrot.slane %v154, %v158
    %v169 = vunpack.c.l.b16 %v146
    %v170 = vunpack.c.l.b16 %v147
    %v171 = vunpack.c.l.b16 %v148
    %v172 = vunpack.c.l.b16 %v149
    %v173 = vunpack.c.l.b16 %v150
    %v174 = vunpack.c.l.b16 %v151
    %v175 = vunpack.c.l.b16 %v152
    %v176 = vunpack.c.l.b16 %v153
    %v177 = vpack.c.b16 %v170, %v169
    %v178 = vpack.c.b16 %v172, %v171
    %v179 = vpack.c.b16 %v174, %v173
    %v180 = vpack.c.b16 %v176, %v175
    %vm185 = vcmask 523264
    %v187 = vsel %vm185, %v145, 0
    %189 = vmatprep.subr.bf16.mxu0 0
    %190 = vmatpush1.bf16.msra.mxu0 0
    %191 = vmatprep.subr.bf16.mxu0 0
    %192 = vmatpush1.bf16.msra.mxu0 0
    %193 = vmatprep.subr.bf16.mxu0 0
    %194 = vmatpush1.bf16.msra.mxu0 0
    %195 = vmatprep.subr.bf16.mxu0 0
    %196 = vmatpush1.bf16.msra.mxu0 0
    %197 = vmatprep.subr.bf16.mxu0 0
    %198 = vmatpush1.bf16.msra.mxu0 %v180
    %199 = vmatprep.subr.bf16.mxu0 0
    %200 = vmatpush1.bf16.msra.mxu0 %v179
    %201 = vmatprep.subr.bf16.mxu0 0
    %202 = vmatpush1.bf16.msra.mxu0 %v178
    %203 = vmatprep.subr.bf16.mxu0 0
    %204 = vmatpush1.bf16.msra.mxu0 %v177
    %205 = vmatprep.subr.bf16.mxu0 0
    %206 = vmatpush2.bf16.msra.mxu0 0
    %207 = vmatprep.subr.bf16.mxu0 0
    %208 = vmatpush2.bf16.msra.mxu0 0
    %209 = vmatprep.subr.bf16.mxu0 0
    %210 = vmatpush2.bf16.msra.mxu0 0
    %211 = vmatprep.subr.bf16.mxu0 0
    %212 = vmatpush2.bf16.msra.mxu0 0
    %213 = vmatprep.subr.bf16.mxu0 0
    %214 = vmatpush2.bf16.msra.mxu0 0
    %215 = vmatprep.subr.bf16.mxu0 0
    %216 = vmatpush2.bf16.msra.mxu0 0
    %217 = vmatprep.subr.bf16.mxu0 0
    %218 = vmatpush2.bf16.msra.mxu0 0
    %219 = vmatprep.subr.bf16.mxu0 0
    %220 = vmatpush2.bf16.msra.mxu0 0
    %221 = vmatprep.mubr.bf16.mxu0 0
    %222 = vmatmul.mubr.bf16.gmra.mxu0 %v187
    %v223 = vpop.f32.mrf.mxu0
    %v224 = vadd.f32 %v159, %v223
    %v225 = vpop.f32.mrf.mxu0
    %v226 = vpop.f32.mrf.mxu0
    %v227 = vpop.f32.mrf.mxu0
    %228 = vdwg.mxu0
    %v229 = vld [vmem:[%s5] sm:$0xff]
    %vm230 = vcmp.gt.f32.partialorder %v229, 0.0
    %v231 = vsel %vm230, 0.0, -1e+09
    %v232 = vadd.f32 %v224, %v231
    %233 = vst [vmem:[#allocation10] sm:$0xff] %v232
    // Predicated region
    $region42: #{tpu_custom_call.1} parent=1 // pred_check
      _
    $region43: #{tpu_custom_call.1} parent=1 // pred_check_branch
      %235 = sbr.rel (0) target = $region45
    $region44: #{tpu_custom_call.1} parent=1 // pred_region
      %s237 = ssub.s32 128, 128
      %238 = vsyncadd [#allocation4], %s237
      %s240 = sshll.u32 [#allocation10], 4
      %s241 = int_to_ptr.vmem [resolvable:$true] %s240
      %243 = dma.vmem_to_hbm [thread:$0]  %s241, 128, %s6, [#allocation4]
    $region45: #{tpu_custom_call.1} parent=1 // pred_fallthru
      _
    // Predicated region
    $region46: #{tpu_custom_call.1} parent=1 // pred_check
      _
    $region47: #{tpu_custom_call.1} parent=1 // pred_check_branch
      %245 = sbr.rel (0) target = $region49
    $region48: #{tpu_custom_call.1} parent=1 // pred_region
      %246 = dma.done [#allocation4], 128
    $region49: #{tpu_custom_call.1} parent=1 // pred_fallthru
      _
    %247 = vsyncpa [#allocation3], 1
    %248 = vsyncpa [#allocation6], 1
    %249 = vsyncpa [#allocation9], 1
    %250 = vsyncpa [#allocation4], 1

</llo_original>
